<compile_context>
chip_gen: v5e
topology: v5e:2x2
jax: 0.10.0
libtpu: 0.0.40
codegen_flags: <defaults>
</compile_context>

<pallas_src>
import jax
import jax.numpy as jnp
from jax.experimental import pallas as pl
from jax.experimental.pallas import tpu as pltpu

_HIDDEN = 1024          # embed / backbone feature width (nn.Linear(..., 1024))
_FUSED = 2 * _HIDDEN    # concat width fed to the classifier


def _round_up(x, m):
    return ((x + m - 1) // m) * m


# ---------------------------------------------------------------------------
# Kernel 1: feature stage
#   h[:, :1024] = gap @ W_img + b_img    (backbone stand-in projection, tiny)
#   h[:, 1024:] = q   @ W_emb + b_emb    (question embedding, K-tiled reduction)
# Grid: (batch tiles, K tiles over num_embeddings)
# ---------------------------------------------------------------------------
def _feature_kernel(gap_ref, w_img_ref, b_img_ref,
                    q_ref, w_emb_ref, b_emb_ref,
                    h_ref, acc_ref):
    k = pl.program_id(1)

    @pl.when(k == 0)
    def _():
        acc_ref[...] = jnp.zeros_like(acc_ref)

    acc_ref[...] += jnp.dot(q_ref[...], w_emb_ref[...],
                            preferred_element_type=jnp.float32)

    @pl.when(k == pl.num_programs(1) - 1)
    def _():
        img_feat = (jnp.dot(gap_ref[...], w_img_ref[...],
                            preferred_element_type=jnp.float32)
                    + b_img_ref[...])
        h_ref[:, 0:_HIDDEN] = img_feat.astype(h_ref.dtype)
        h_ref[:, _HIDDEN:_FUSED] = (acc_ref[...] + b_emb_ref[...]).astype(h_ref.dtype)


# ---------------------------------------------------------------------------
# Kernel 2: classifier  out = h @ W_fc + b_fc
# Grid: (batch tiles, class tiles, K tiles over the 2048 fused dim)
# ---------------------------------------------------------------------------
def _classifier_kernel(h_ref, w_fc_ref, b_fc_ref, o_ref, acc_ref):
    k = pl.program_id(2)

    @pl.when(k == 0)
    def _():
        acc_ref[...] = jnp.zeros_like(acc_ref)

    acc_ref[...] += jnp.dot(h_ref[...], w_fc_ref[...],
                            preferred_element_type=jnp.float32)

    @pl.when(k == pl.num_programs(2) - 1)
    def _():
        o_ref[...] = (acc_ref[...] + b_fc_ref[...]).astype(o_ref.dtype)


def baseline_net_forward(image, question_encoding, params,
                         *, tm=128, tk=512, tn=128, tk_fc=512):
    """image: (B, C, H, W) f32 NCHW; question_encoding: (B, num_embeddings) f32."""
    B, C, H, W = image.shape
    V = question_encoding.shape[1]
    N = params["w_fc"].shape[1]

    # ---- backbone stand-in step 1: global average pool in the wrapper ----
    gap = jnp.mean(image.reshape(B, C, H * W), axis=2)            # (B, C)

    # ---- pad to TPU-friendly tile multiples (sublane=8, lane=128) ----
    tm = min(tm, _round_up(B, 8))
    B_pad = _round_up(B, tm)
    tk = min(tk, _round_up(V, 128))
    V_pad = _round_up(V, tk)
    tn = min(tn, _round_up(N, 128))
    N_pad = _round_up(N, tn)

    gap_p = jnp.pad(gap, ((0, B_pad - B), (0, 0)))
    q_p = jnp.pad(question_encoding, ((0, B_pad - B), (0, V_pad - V)))
    w_emb_p = jnp.pad(params["w_emb"], ((0, V_pad - V), (0, 0)))
    w_fc_p = jnp.pad(params["w_fc"], ((0, 0), (0, N_pad - N)))
    b_fc_p = jnp.pad(params["b_fc"], ((0, 0), (0, N_pad - N)))
    # (In production, pad the weights once at init rather than per call.)

    # ---------------- feature kernel ----------------
    grid_a = (B_pad // tm, V_pad // tk)
    flops_a = 2 * B_pad * (C * _HIDDEN + V_pad * _HIDDEN)
    bytes_a = 4 * (B_pad * C + C * _HIDDEN + _HIDDEN
                   + B_pad * V_pad + V_pad * _HIDDEN + _HIDDEN
                   + B_pad * _FUSED)

    h = pl.pallas_call(
        _feature_kernel,
        out_shape=jax.ShapeDtypeStruct((B_pad, _FUSED), jnp.float32),
        grid=grid_a,
        in_specs=[
            pl.BlockSpec((tm, C), lambda i, k: (i, 0)),            # gap
            pl.BlockSpec((C, _HIDDEN), lambda i, k: (0, 0)),       # w_img
            pl.BlockSpec((1, _HIDDEN), lambda i, k: (0, 0)),       # b_img
            pl.BlockSpec((tm, tk), lambda i, k: (i, k)),           # question
            pl.BlockSpec((tk, _HIDDEN), lambda i, k: (k, 0)),      # w_emb
            pl.BlockSpec((1, _HIDDEN), lambda i, k: (0, 0)),       # b_emb
        ],
        out_specs=pl.BlockSpec((tm, _FUSED), lambda i, k: (i, 0)),
        scratch_shapes=[pltpu.VMEM((tm, _HIDDEN), jnp.float32)],
        compiler_params=pltpu.CompilerParams(
            dimension_semantics=("parallel", "arbitrary"),
            vmem_limit_bytes=32 * 1024 * 1024),
        cost_estimate=pl.CostEstimate(flops=flops_a, transcendentals=0,
                                      bytes_accessed=bytes_a),
    )(gap_p, params["w_img"], params["b_img"], q_p, w_emb_p, params["b_emb"])

    # ---------------- classifier kernel ----------------
    grid_b = (B_pad // tm, N_pad // tn, _FUSED // tk_fc)
    flops_b = 2 * B_pad * _FUSED * N_pad
    bytes_b = 4 * (B_pad * _FUSED + _FUSED * N_pad + N_pad + B_pad * N_pad)

    out = pl.pallas_call(
        _classifier_kernel,
        out_shape=jax.ShapeDtypeStruct((B_pad, N_pad), jnp.float32),
        grid=grid_b,
        in_specs=[
            pl.BlockSpec((tm, tk_fc), lambda i, j, k: (i, k)),     # h
            pl.BlockSpec((tk_fc, tn), lambda i, j, k: (k, j)),     # w_fc
            pl.BlockSpec((1, tn), lambda i, j, k: (0, j)),         # b_fc
        ],
        out_specs=pl.BlockSpec((tm, tn), lambda i, j, k: (i, j)),
        scratch_shapes=[pltpu.VMEM((tm, tn), jnp.float32)],
        compiler_params=pltpu.CompilerParams(
            dimension_semantics=("parallel", "parallel", "arbitrary"),
            vmem_limit_bytes=32 * 1024 * 1024),
        cost_estimate=pl.CostEstimate(flops=flops_b, transcendentals=0,
                                      bytes_accessed=bytes_b),
    )(h, w_fc_p, b_fc_p)

    return out[:B, :N]


def init_params(key, in_channels, num_embeddings, num_classes):
    ks = jax.random.split(key, 6)
    scale = 0.02
    return {
        # GoogLeNet stand-in projection: C -> 1024
        "w_img": scale * jax.random.normal(ks[0], (in_channels, _HIDDEN), jnp.float32),
        "b_img": scale * jax.random.normal(ks[1], (1, _HIDDEN), jnp.float32),
        # embed = nn.Linear(num_embeddings, 1024)
        "w_emb": scale * jax.random.normal(ks[2], (num_embeddings, _HIDDEN), jnp.float32),
        "b_emb": scale * jax.random.normal(ks[3], (1, _HIDDEN), jnp.float32),
        # fc = nn.Linear(1024 + 1024, num_classes)
        "w_fc": scale * jax.random.normal(ks[4], (_FUSED, num_classes), jnp.float32),
        "b_fc": scale * jax.random.normal(ks[5], (1, num_classes), jnp.float32),
    }


if __name__ == "__main__":
    B, C, H, W = 2, 3, 16, 16
    num_embeddings = 32
    num_classes = 16

    key = jax.random.PRNGKey(0)
    k_img, k_q, k_p = jax.random.split(key, 3)

    image = jax.random.normal(k_img, (B, C, H, W), jnp.float32)
    question_encoding = jax.random.normal(k_q, (B, num_embeddings), jnp.float32)
    params = init_params(k_p, C, num_embeddings, num_classes)

    fwd = jax.jit(baseline_net_forward)
    out = jax.block_until_ready(fwd(image, question_encoding, params))

    # Pure-JAX reference of the same (stand-in) forward.
    gap = jnp.mean(image.reshape(B, C, H * W), axis=2)
    img_feat = gap @ params["w_img"] + params["b_img"]
    ques_feat = question_encoding @ params["w_emb"] + params["b_emb"]
    ref = jnp.concatenate([img_feat, ques_feat], axis=1) @ params["w_fc"] + params["b_fc"]

    assert out.shape == (B, num_classes)
    assert jnp.allclose(out, ref, atol=5e-4, rtol=5e-4), \
        float(jnp.max(jnp.abs(out - ref)))

    print("KERNEL_OK")
</pallas_src>

<mosaic_0001>
module attributes {stable_mosaic.version = 11 : i64} {
  func.func @_classifier_kernel(%arg0: i32, %arg1: i32, %arg2: i32, %arg3: memref<8x512xf32, #tpu.memory_space<vmem>>, %arg4: memref<512x128xf32, #tpu.memory_space<vmem>>, %arg5: memref<1x128xf32, #tpu.memory_space<vmem>>, %arg6: memref<8x128xf32, #tpu.memory_space<vmem>>, %arg7: memref<8x128xf32, #tpu.memory_space<vmem>>) attributes {dimension_semantics = [#tpu.dimension_semantics<parallel>, #tpu.dimension_semantics<parallel>, #tpu.dimension_semantics<arbitrary>], iteration_bounds = array<i64: 1, 1, 4>, scalar_prefetch = 0 : i64, scratch_operands = 1 : i64, tpu.core_type = #tpu.core_type<tc>, window_params = [{transform_indices = @transform_0, window_bounds = array<i64: 8, 512>}, {transform_indices = @transform_1, window_bounds = array<i64: 512, 128>}, {transform_indices = @transform_2, window_bounds = array<i64: 1, 128>}, {transform_indices = @transform_3, window_bounds = array<i64: 8, 128>}]} {
    %c0_i32 = arith.constant 0 : i32
    %0 = arith.cmpi eq, %arg2, %c0_i32 : i32
    %1 = arith.extui %0 : i1 to i32
    %c0_i32_0 = arith.constant 0 : i32
    %2 = arith.cmpi ne, %1, %c0_i32_0 : i32
    scf.if %2 {
      %cst_9 = arith.constant 0.000000e+00 : f32
      %12 = vector.broadcast %cst_9 : f32 to vector<8x128xf32>
      %c0_10 = arith.constant 0 : index
      %c0_11 = arith.constant 0 : index
      %13 = vector.load %arg7[%c0_10, %c0_11] : memref<8x128xf32, #tpu.memory_space<vmem>>, vector<8x128xf32>
      tpu.vector_store %arg7[%c0_10, %c0_11], %12 {strides = array<i32>} : memref<8x128xf32, #tpu.memory_space<vmem>>, vector<8x128xf32>,
    } else {
    }
    %c0 = arith.constant 0 : index
    %c0_1 = arith.constant 0 : index
    %3 = vector.load %arg7[%c0, %c0_1] : memref<8x128xf32, #tpu.memory_space<vmem>>, vector<8x128xf32>
    %c0_2 = arith.constant 0 : index
    %c0_3 = arith.constant 0 : index
    %4 = vector.load %arg3[%c0_2, %c0_3] : memref<8x512xf32, #tpu.memory_space<vmem>>, vector<8x512xf32>
    %c0_4 = arith.constant 0 : index
    %c0_5 = arith.constant 0 : index
    %5 = vector.load %arg4[%c0_4, %c0_5] : memref<512x128xf32, #tpu.memory_space<vmem>>, vector<512x128xf32>
    %cst = arith.constant dense<0.000000e+00> : vector<8x128xf32>
    %6 = tpu.matmul %4, %5, %cst {dimension_numbers = #tpu.dot_dimension_numbers<[1], [0], [0], [1], [0, 0, 1, 1], [], []>} : vector<8x512xf32>, vector<512x128xf32>, vector<8x128xf32> -> vector<8x128xf32>
    %7 = arith.addf %3, %6 : vector<8x128xf32>
    %c0_6 = arith.constant 0 : index
    %c0_7 = arith.constant 0 : index
    %8 = vector.load %arg7[%c0_6, %c0_7] : memref<8x128xf32, #tpu.memory_space<vmem>>, vector<8x128xf32>
    tpu.vector_store %arg7[%c0_6, %c0_7], %7 {strides = array<i32>} : memref<8x128xf32, #tpu.memory_space<vmem>>, vector<8x128xf32>,
    %c3_i32 = arith.constant 3 : i32
    %9 = arith.cmpi eq, %arg2, %c3_i32 : i32
    %10 = arith.extui %9 : i1 to i32
    %c0_i32_8 = arith.constant 0 : i32
    %11 = arith.cmpi ne, %10, %c0_i32_8 : i32
    scf.if %11 {
      %c0_9 = arith.constant 0 : index
      %c0_10 = arith.constant 0 : index
      %12 = vector.load %arg7[%c0_9, %c0_10] : memref<8x128xf32, #tpu.memory_space<vmem>>, vector<8x128xf32>
      %c0_11 = arith.constant 0 : index
      %c0_12 = arith.constant 0 : index
      %13 = vector.load %arg5[%c0_11, %c0_12] : memref<1x128xf32, #tpu.memory_space<vmem>>, vector<1x128xf32>
      %14 = vector.broadcast %13 : vector<1x128xf32> to vector<8x128xf32>
      %15 = arith.addf %12, %14 : vector<8x128xf32>
      %c0_13 = arith.constant 0 : index
      %c0_14 = arith.constant 0 : index
      %16 = vector.load %arg6[%c0_13, %c0_14] : memref<8x128xf32, #tpu.memory_space<vmem>>, vector<8x128xf32>
      tpu.vector_store %arg6[%c0_13, %c0_14], %15 {strides = array<i32>} : memref<8x128xf32, #tpu.memory_space<vmem>>, vector<8x128xf32>,
    } else {
    }
    return
  }
  func.func @transform_0(%arg0: i32, %arg1: i32, %arg2: i32) -> (i32, i32) {
    %c0_i32 = arith.constant 0 : i32
    return %arg0, %arg2 : i32, i32
  }
  func.func @transform_1(%arg0: i32, %arg1: i32, %arg2: i32) -> (i32, i32) {
    %c0_i32 = arith.constant 0 : i32
    return %arg2, %arg1 : i32, i32
  }
  func.func @transform_2(%arg0: i32, %arg1: i32, %arg2: i32) -> (i32, i32) {
    %c0_i32 = arith.constant 0 : i32
    %c0_i32_0 = arith.constant 0 : i32
    return %c0_i32, %arg1 : i32, i32
  }
  func.func @transform_3(%arg0: i32, %arg1: i32, %arg2: i32) -> (i32, i32) {
    %c0_i32 = arith.constant 0 : i32
    return %arg0, %arg1 : i32, i32
  }
}

module attributes {stable_mosaic.version = 11 : i64} {
  func.func @_feature_kernel(%arg0: i32, %arg1: i32, %arg2: memref<8x3xf32, #tpu.memory_space<vmem>>, %arg3: memref<3x1024xf32, #tpu.memory_space<vmem>>, %arg4: memref<1x1024xf32, #tpu.memory_space<vmem>>, %arg5: memref<8x128xf32, #tpu.memory_space<vmem>>, %arg6: memref<128x1024xf32, #tpu.memory_space<vmem>>, %arg7: memref<1x1024xf32, #tpu.memory_space<vmem>>, %arg8: memref<8x2048xf32, #tpu.memory_space<vmem>>, %arg9: memref<8x1024xf32, #tpu.memory_space<vmem>>) attributes {dimension_semantics = [#tpu.dimension_semantics<parallel>, #tpu.dimension_semantics<arbitrary>], iteration_bounds = array<i64: 1, 1>, scalar_prefetch = 0 : i64, scratch_operands = 1 : i64, tpu.core_type = #tpu.core_type<tc>, window_params = [{transform_indices = @transform_0, window_bounds = array<i64: 8, 3>}, {pipeline_mode = #tpu.pipeline_mode<synchronous>, transform_indices = @transform_1, window_bounds = array<i64: 3, 1024>}, {pipeline_mode = #tpu.pipeline_mode<synchronous>, transform_indices = @transform_2, window_bounds = array<i64: 1, 1024>}, {transform_indices = @transform_3, window_bounds = array<i64: 8, 128>}, {transform_indices = @transform_4, window_bounds = array<i64: 128, 1024>}, {pipeline_mode = #tpu.pipeline_mode<synchronous>, transform_indices = @transform_5, window_bounds = array<i64: 1, 1024>}, {transform_indices = @transform_6, window_bounds = array<i64: 8, 2048>}]} {
    %c0_i32 = arith.constant 0 : i32
    %0 = arith.cmpi eq, %arg1, %c0_i32 : i32
    %1 = arith.extui %0 : i1 to i32
    %c0_i32_0 = arith.constant 0 : i32
    %2 = arith.cmpi ne, %1, %c0_i32_0 : i32
    scf.if %2 {
      %cst_10 = arith.constant 0.000000e+00 : f32
      %12 = vector.broadcast %cst_10 : f32 to vector<8x1024xf32>
      %c0_11 = arith.constant 0 : index
      %c0_12 = arith.constant 0 : index
      %13 = vector.load %arg9[%c0_11, %c0_12] : memref<8x1024xf32, #tpu.memory_space<vmem>>, vector<8x1024xf32>
      tpu.vector_store %arg9[%c0_11, %c0_12], %12 {strides = array<i32>} : memref<8x1024xf32, #tpu.memory_space<vmem>>, vector<8x1024xf32>,
    } else {
    }
    %c0 = arith.constant 0 : index
    %c0_1 = arith.constant 0 : index
    %3 = vector.load %arg9[%c0, %c0_1] : memref<8x1024xf32, #tpu.memory_space<vmem>>, vector<8x1024xf32>
    %c0_2 = arith.constant 0 : index
    %c0_3 = arith.constant 0 : index
    %4 = vector.load %arg5[%c0_2, %c0_3] : memref<8x128xf32, #tpu.memory_space<vmem>>, vector<8x128xf32>
    %c0_4 = arith.constant 0 : index
    %c0_5 = arith.constant 0 : index
    %5 = vector.load %arg6[%c0_4, %c0_5] : memref<128x1024xf32, #tpu.memory_space<vmem>>, vector<128x1024xf32>
    %cst = arith.constant dense<0.000000e+00> : vector<8x1024xf32>
    %6 = tpu.matmul %4, %5, %cst {dimension_numbers = #tpu.dot_dimension_numbers<[1], [0], [0], [1], [0, 0, 1, 1], [], []>} : vector<8x128xf32>, vector<128x1024xf32>, vector<8x1024xf32> -> vector<8x1024xf32>
    %7 = arith.addf %3, %6 : vector<8x1024xf32>
    %c0_6 = arith.constant 0 : index
    %c0_7 = arith.constant 0 : index
    %8 = vector.load %arg9[%c0_6, %c0_7] : memref<8x1024xf32, #tpu.memory_space<vmem>>, vector<8x1024xf32>
    tpu.vector_store %arg9[%c0_6, %c0_7], %7 {strides = array<i32>} : memref<8x1024xf32, #tpu.memory_space<vmem>>, vector<8x1024xf32>,
    %c0_i32_8 = arith.constant 0 : i32
    %9 = arith.cmpi eq, %arg1, %c0_i32_8 : i32
    %10 = arith.extui %9 : i1 to i32
    %c0_i32_9 = arith.constant 0 : i32
    %11 = arith.cmpi ne, %10, %c0_i32_9 : i32
    scf.if %11 {
      %c0_10 = arith.constant 0 : index
      %c0_11 = arith.constant 0 : index
      %12 = vector.load %arg2[%c0_10, %c0_11] : memref<8x3xf32, #tpu.memory_space<vmem>>, vector<8x3xf32>
      %c0_12 = arith.constant 0 : index
      %c0_13 = arith.constant 0 : index
      %13 = vector.load %arg3[%c0_12, %c0_13] : memref<3x1024xf32, #tpu.memory_space<vmem>>, vector<3x1024xf32>
      %cst_14 = arith.constant dense<0.000000e+00> : vector<8x1024xf32>
      %14 = tpu.matmul %12, %13, %cst_14 {dimension_numbers = #tpu.dot_dimension_numbers<[1], [0], [0], [1], [0, 0, 1, 1], [], []>} : vector<8x3xf32>, vector<3x1024xf32>, vector<8x1024xf32> -> vector<8x1024xf32>
      %c0_15 = arith.constant 0 : index
      %c0_16 = arith.constant 0 : index
      %15 = vector.load %arg4[%c0_15, %c0_16] : memref<1x1024xf32, #tpu.memory_space<vmem>>, vector<1x1024xf32>
      %16 = vector.broadcast %15 : vector<1x1024xf32> to vector<8x1024xf32>
      %17 = arith.addf %14, %16 : vector<8x1024xf32>
      %c0_17 = arith.constant 0 : index
      %c0_18 = arith.constant 0 : index
      %18 = vector.load %arg8[%c0_17, %c0_18] : memref<8x2048xf32, #tpu.memory_space<vmem>>, vector<8x1024xf32>
      tpu.vector_store %arg8[%c0_17, %c0_18], %17 {strides = array<i32>} : memref<8x2048xf32, #tpu.memory_space<vmem>>, vector<8x1024xf32>,
      %c0_19 = arith.constant 0 : index
      %c0_20 = arith.constant 0 : index
      %19 = vector.load %arg9[%c0_19, %c0_20] : memref<8x1024xf32, #tpu.memory_space<vmem>>, vector<8x1024xf32>
      %c0_21 = arith.constant 0 : index
      %c0_22 = arith.constant 0 : index
      %20 = vector.load %arg7[%c0_21, %c0_22] : memref<1x1024xf32, #tpu.memory_space<vmem>>, vector<1x1024xf32>
      %21 = vector.broadcast %20 : vector<1x1024xf32> to vector<8x1024xf32>
      %22 = arith.addf %19, %21 : vector<8x1024xf32>
      %c0_23 = arith.constant 0 : index
      %c1024 = arith.constant 1024 : index
      %23 = vector.load %arg8[%c0_23, %c1024] : memref<8x2048xf32, #tpu.memory_space<vmem>>, vector<8x1024xf32>
      tpu.vector_store %arg8[%c0_23, %c1024], %22 {strides = array<i32>} : memref<8x2048xf32, #tpu.memory_space<vmem>>, vector<8x1024xf32>,
    } else {
    }
    return
  }
  func.func @transform_0(%arg0: i32, %arg1: i32) -> (i32, i32) {
    %c0_i32 = arith.constant 0 : i32
    %c0_i32_0 = arith.constant 0 : i32
    return %arg0, %c0_i32 : i32, i32
  }
  func.func @transform_1(%arg0: i32, %arg1: i32) -> (i32, i32) {
    %c0_i32 = arith.constant 0 : i32
    %c0_i32_0 = arith.constant 0 : i32
    %c0_i32_1 = arith.constant 0 : i32
    return %c0_i32, %c0_i32_0 : i32, i32
  }
  func.func @transform_2(%arg0: i32, %arg1: i32) -> (i32, i32) {
    %c0_i32 = arith.constant 0 : i32
    %c0_i32_0 = arith.constant 0 : i32
    %c0_i32_1 = arith.constant 0 : i32
    return %c0_i32, %c0_i32_0 : i32, i32
  }
  func.func @transform_3(%arg0: i32, %arg1: i32) -> (i32, i32) {
    %c0_i32 = arith.constant 0 : i32
    return %arg0, %arg1 : i32, i32
  }
  func.func @transform_4(%arg0: i32, %arg1: i32) -> (i32, i32) {
    %c0_i32 = arith.constant 0 : i32
    %c0_i32_0 = arith.constant 0 : i32
    return %arg1, %c0_i32 : i32, i32
  }
  func.func @transform_5(%arg0: i32, %arg1: i32) -> (i32, i32) {
    %c0_i32 = arith.constant 0 : i32
    %c0_i32_0 = arith.constant 0 : i32
    %c0_i32_1 = arith.constant 0 : i32
    return %c0_i32, %c0_i32_0 : i32, i32
  }
  func.func @transform_6(%arg0: i32, %arg1: i32) -> (i32, i32) {
    %c0_i32 = arith.constant 0 : i32
    %c0_i32_0 = arith.constant 0 : i32
    return %arg0, %c0_i32 : i32, i32
  }
}

</mosaic_0001>

<llo_original>
// kernel: baseline_net_forward.3
$region0: #{baseline_net_forward.3}
  #allocation0 [shape = 'u32[]', space=smem, size = 0x4, offset = 0x4, fixed_abs, tag = 'smem constant byte address 0x4 - core index']
  #allocation1 [shape = 'u32[72,128]{1,0:T(1,128)}', space=vmem, size = 0x9000, scoped, tag = 'internal scratch']
  #allocation2 [shape = 'f32[8,128]{1,0:T(8,128)}', space=vmem, size = 0x1000, scoped, tag = 'scratch operand']
  %s0 = inlined_call_operand.vmem [shape: f32[8,2048], index: 0, kind: input, shape index: {}]
  %s1 = inlined_call_operand.vmem [shape: f32[2048,128], index: 1, kind: input, shape index: {}]
  %s2 = inlined_call_operand.vmem [shape: f32[1,128], index: 2, kind: input, shape index: {}]
  %s3 = inlined_call_operand.vmem [shape: f32[8,128], index: 3, kind: output, shape index: {}]
  %s4 = sld [smem:[#allocation0]]
  $region53: #{baseline_net_forward.3} parent=0
    _
  %s6 = ssub.s32 1, %s4
  %s7 = scalar_select 0, %s6, %s4
  loop: start=0, step=1, limit=6
  $region2: #{baseline_net_forward.3} parent=0 // loop_pre_header
    _
  $region3: #{baseline_net_forward.3} parent=0 // loop_header
    %s9 = sphi 0, %s13
    %p10 = scmp.ge.s32.totalorder %s9, 6
    %s16 = sphi 0, %s35
    %s17 = sphi 0, %s31
    %s18 = sphi 0, %s27
    %s19 = sphi 0, %s16
    %s20 = sphi 0, %s17
    %s21 = sphi 0, %s18
    %s22 = sphi 0, %s19
    %s23 = sphi 0, %s20
    %s24 = sphi 0, %s21
    %s40 = sphi 0, %s42
    %s43 = sphi 0, %s40
    %s44 = sphi 0, %s43
    %s60 = sphi 0, %s44
    %s68 = sphi 0, %s70
    %s71 = sphi 0, %s68
    %s72 = sphi 0, %s71
    %s88 = sphi 0, %s72
    %s94 = sphi 0, %s96
    %s97 = sphi 0, %s94
    %s98 = sphi 0, %s97
    %s114 = sphi 0, %s98
    %s122 = sphi 0, %s124
    %s125 = sphi 0, %s122
    %s126 = sphi 0, %s125
    %s142 = sphi 0, %s126
  $region4: #{baseline_net_forward.3} parent=0 // loop_header_branch
    %12 = sbr.rel (%p10) target = $region8
  $region5: #{baseline_net_forward.3} parent=0 // loop_body
    %s14 = ssub.s32 %s9, 1
    %s15 = ssub.s32 %s9, 2
    %s25 = sadd.s32 1, %s18
    %p26 = scmp.ge.s32.totalorder %s25, 4
    %s27 = scalar_select %p26, 0, %s25
    %s28 = sadd.s32 1, %s17
    %s29 = scalar_select %p26, %s28, %s17
    %p30 = scmp.ge.s32.totalorder %s29, 1
    %s31 = scalar_select %p30, 0, %s29
    %s32 = sadd.s32 1, %s16
    %s33 = scalar_select %p30, %s32, %s16
    %p34 = scmp.ge.s32.totalorder %s33, 1
    %s35 = scalar_select %p34, 0, %s33
    %s36 = ssub.s32 %s16, %s35
    %s37 = ssub.s32 %s18, %s27
    %s38 = sor.u32 %s36, %s37
    %p39 = scmp.eq.s32.totalorder %s38, 0
    %s41 = sadd.s32 %s40, 1
    %s42 = scalar_select %p39, %s40, %s41
    %p45 = pneg %p39
    %p46 = scmp.eq.s32.totalorder %s9, 3
    %p47 = por %p45, %p46
    %p48 = scmp.ne.s32.totalorder %s40, %s43
    %p49 = scmp.eq.s32.totalorder %s9, 0
    %p50 = por %p48, %p49
    %p51 = scmp.ne.s32.totalorder %s40, %s43
    %p52 = scmp.eq.s32.totalorder %s14, 3
    %p53 = por %p51, %p52
    %p54 = scmp.ne.s32.totalorder %s43, %s44
    %p55 = scmp.eq.s32.totalorder %s14, 0
    %p56 = por %p54, %p55
    %p57 = scmp.ne.s32.totalorder %s43, %s44
    %p58 = scmp.eq.s32.totalorder %s15, 3
    %p59 = por %p57, %p58
    %p61 = scmp.ne.s32.totalorder %s44, %s60
    %p62 = scmp.eq.s32.totalorder %s15, 0
    %p63 = por %p61, %p62
    %s64 = ssub.s32 %s18, %s27
    %s65 = ssub.s32 %s17, %s31
    %s66 = sor.u32 %s64, %s65
    %p67 = scmp.eq.s32.totalorder %s66, 0
    %s69 = sadd.s32 %s68, 1
    %s70 = scalar_select %p67, %s68, %s69
    %p73 = pneg %p67
    %p74 = scmp.eq.s32.totalorder %s9, 3
    %p75 = por %p73, %p74
    %p76 = scmp.ne.s32.totalorder %s68, %s71
    %p77 = scmp.eq.s32.totalorder %s9, 0
    %p78 = por %p76, %p77
    %p79 = scmp.ne.s32.totalorder %s68, %s71
    %p80 = scmp.eq.s32.totalorder %s14, 3
    %p81 = por %p79, %p80
    %p82 = scmp.ne.s32.totalorder %s71, %s72
    %p83 = scmp.eq.s32.totalorder %s14, 0
    %p84 = por %p82, %p83
    %p85 = scmp.ne.s32.totalorder %s71, %s72
    %p86 = scmp.eq.s32.totalorder %s15, 3
    %p87 = por %p85, %p86
    %p89 = scmp.ne.s32.totalorder %s72, %s88
    %p90 = scmp.eq.s32.totalorder %s15, 0
    %p91 = por %p89, %p90
    %s92 = ssub.s32 %s17, %s31
    %p93 = scmp.eq.s32.totalorder %s92, 0
    %s95 = sadd.s32 %s94, 1
    %s96 = scalar_select %p93, %s94, %s95
    %p99 = pneg %p93
    %p100 = scmp.eq.s32.totalorder %s9, 3
    %p101 = por %p99, %p100
    %p102 = scmp.ne.s32.totalorder %s94, %s97
    %p103 = scmp.eq.s32.totalorder %s9, 0
    %p104 = por %p102, %p103
    %p105 = scmp.ne.s32.totalorder %s94, %s97
    %p106 = scmp.eq.s32.totalorder %s14, 3
    %p107 = por %p105, %p106
    %p108 = scmp.ne.s32.totalorder %s97, %s98
    %p109 = scmp.eq.s32.totalorder %s14, 0
    %p110 = por %p108, %p109
    %p111 = scmp.ne.s32.totalorder %s97, %s98
    %p112 = scmp.eq.s32.totalorder %s15, 3
    %p113 = por %p111, %p112
    %p115 = scmp.ne.s32.totalorder %s98, %s114
    %p116 = scmp.eq.s32.totalorder %s15, 0
    %p117 = por %p115, %p116
    %s118 = ssub.s32 %s16, %s35
    %s119 = ssub.s32 %s17, %s31
    %s120 = sor.u32 %s118, %s119
    %p121 = scmp.eq.s32.totalorder %s120, 0
    %s123 = sadd.s32 %s122, 1
    %s124 = scalar_select %p121, %s122, %s123
    %p127 = pneg %p121
    %p128 = scmp.eq.s32.totalorder %s9, 3
    %p129 = por %p127, %p128
    %p130 = scmp.ne.s32.totalorder %s122, %s125
    %p131 = scmp.eq.s32.totalorder %s9, 0
    %p132 = por %p130, %p131
    %p133 = scmp.ne.s32.totalorder %s122, %s125
    %p134 = scmp.eq.s32.totalorder %s14, 3
    %p135 = por %p133, %p134
    %p136 = scmp.ne.s32.totalorder %s125, %s126
    %p137 = scmp.eq.s32.totalorder %s14, 0
    %p138 = por %p136, %p137
    %p139 = scmp.ne.s32.totalorder %s125, %s126
    %p140 = scmp.eq.s32.totalorder %s15, 3
    %p141 = por %p139, %p140
    %p143 = scmp.ne.s32.totalorder %s126, %s142
    %p144 = scmp.eq.s32.totalorder %s15, 0
    %p145 = por %p143, %p144
    %p146 = scmp.le.s32.totalorder 1, %s9
    %p147 = scmp.lt.s32.totalorder %s9, 5
    %p148 = pnand %p146, %p147
    %p149 = pneg %p148
    // Predicated region
    $region9: #{baseline_net_forward.3} parent=5 // pred_check
      _
    $region10: #{baseline_net_forward.3} parent=5 // pred_check_branch
      %151 = sbr.rel (%p148) target = $region12
    $region11: #{baseline_net_forward.3} parent=5 // pred_region
      %s152 = ssub.s32 %s9, 1
      // Predicated region
      $region13: #{baseline_net_forward.3} parent=11 // pred_check
        %p153 = pneg %p110
      $region14: #{baseline_net_forward.3} parent=11 // pred_check_branch
        %155 = sbr.rel (%p153) target = $region16
      $region15: #{baseline_net_forward.3} parent=11 // pred_region
        %p156 = scmp.lt.s32.totalorder %s20, 0
        %s157 = scalar_select %p156, %s20, 0
        %s158 = scalar_lea.vmem %s2, %s157
      $region16: #{baseline_net_forward.3} parent=11 // pred_fallthru
        _
    $region12: #{baseline_net_forward.3} parent=5 // pred_fallthru
      _
    %p159 = scmp.lt.s32.totalorder %s9, 4
    // Predicated region
    $region17: #{baseline_net_forward.3} parent=5 // pred_check
      %p160 = pneg %p159
    $region18: #{baseline_net_forward.3} parent=5 // pred_check_branch
      %162 = sbr.rel (%p160) target = $region20
    $region19: #{baseline_net_forward.3} parent=5 // pred_region
      // Predicated region
      $region21: #{baseline_net_forward.3} parent=19 // pred_check
        %p163 = pneg %p50
      $region22: #{baseline_net_forward.3} parent=19 // pred_check_branch
        %165 = sbr.rel (%p163) target = $region24
      $region23: #{baseline_net_forward.3} parent=19 // pred_region
        %s166 = smul.u32 4, %s18
        %p167 = scmp.lt.s32.totalorder %s16, 0
        %s168 = scalar_select %p167, %s16, 0
        %p169 = scmp.lt.s32.totalorder %s166, 15
        %s170 = scalar_select %p169, %s166, 15
        %s171 = smul.addr %s168, 16
        %s172 = sadd.s32 %s170, %s171
        %s173 = smul.addr %s172, 8
        %s174 = scalar_lea.vmem %s0, %s173
        %s175 = smul.u32 4, %s18
      $region24: #{baseline_net_forward.3} parent=19 // pred_fallthru
        _
      // Predicated region
      $region25: #{baseline_net_forward.3} parent=19 // pred_check
        %p176 = pneg %p78
      $region26: #{baseline_net_forward.3} parent=19 // pred_check_branch
        %178 = sbr.rel (%p176) target = $region28
      $region27: #{baseline_net_forward.3} parent=19 // pred_region
        %s179 = smul.u32 64, %s18
        %p180 = scmp.lt.s32.totalorder %s179, 255
        %s181 = scalar_select %p180, %s179, 255
        %p182 = scmp.lt.s32.totalorder %s17, 0
        %s183 = scalar_select %p182, %s17, 0
        %s184 = sadd.s32 %s183, %s181
        %s185 = smul.addr %s184, 8
        %s186 = scalar_lea.vmem %s1, %s185
        %s187 = smul.u32 64, %s18
      $region28: #{baseline_net_forward.3} parent=19 // pred_fallthru
        _
    $region20: #{baseline_net_forward.3} parent=5 // pred_fallthru
      _
    %p188 = scmp.le.s32.totalorder 1, %s9
    %p189 = scmp.lt.s32.totalorder %s9, 5
    %p190 = pnand %p188, %p189
    %p191 = pneg %p190
    // Predicated region
    $region29: #{baseline_net_forward.3} parent=5 // pred_check
      _
    $region30: #{baseline_net_forward.3} parent=5 // pred_check_branch
      %193 = sbr.rel (%p190) target = $region32
    $region31: #{baseline_net_forward.3} parent=5 // pred_region
      %s194 = ssub.s32 %s9, 1
      %s195 = smul.u32 4, %s21
      %p196 = scmp.lt.s32.totalorder %s19, 0
      %s197 = scalar_select %p196, %s19, 0
      %p198 = scmp.lt.s32.totalorder %s195, 15
      %s199 = scalar_select %p198, %s195, 15
      %s200 = smul.addr %s197, 16
      %s201 = sadd.s32 %s199, %s200
      %s202 = smul.addr %s201, 8
      %s203 = scalar_lea.vmem %s0, %s202
      %p204 = pneg %p56
      %p205 = pneg %p53
      %s206 = smul.u32 64, %s21
      %p207 = scmp.lt.s32.totalorder %s206, 255
      %s208 = scalar_select %p207, %s206, 255
      %p209 = scmp.lt.s32.totalorder %s20, 0
      %s210 = scalar_select %p209, %s20, 0
      %s211 = sadd.s32 %s210, %s208
      %s212 = smul.addr %s211, 8
      %s213 = scalar_lea.vmem %s1, %s212
      %p214 = pneg %p84
      %p215 = pneg %p81
      %p216 = scmp.lt.s32.totalorder %s20, 0
      %s217 = scalar_select %p216, %s20, 0
      %s218 = scalar_lea.vmem %s2, %s217
      %p219 = pneg %p110
      %p220 = pneg %p107
      %p221 = pneg %p138
      %p222 = pneg %p135
      %p223 = scmp.lt.s32.totalorder %s19, 0
      %s224 = scalar_select %p223, %s19, 0
      %p225 = scmp.lt.s32.totalorder %s20, 0
      %s226 = scalar_select %p225, %s20, 0
      %s227 = sadd.s32 %s226, %s224
      %s228 = smul.addr %s227, 8
      %s229 = scalar_lea.vmem %s3, %s228
      %s230 = smul.u32 4, %s21
      %p231 = scmp.lt.s32.totalorder %s19, 0
      %s232 = scalar_select %p231, %s19, 0
      %p233 = scmp.lt.s32.totalorder %s230, 15
      %s234 = scalar_select %p233, %s230, 15
      %s235 = smul.addr %s232, 16
      %s236 = sadd.s32 %s234, %s235
      %s237 = smul.addr %s236, 8
      %s238 = scalar_lea.vmem %s0, %s237
      %s239 = smul.u32 4, %s21
      %s240 = smul.u32 64, %s21
      %p241 = scmp.lt.s32.totalorder %s240, 255
      %s242 = scalar_select %p241, %s240, 255
      %p243 = scmp.lt.s32.totalorder %s20, 0
      %s244 = scalar_select %p243, %s20, 0
      %s245 = sadd.s32 %s244, %s242
      %s246 = smul.addr %s245, 8
      %s247 = scalar_lea.vmem %s1, %s246
      %s248 = smul.u32 64, %s21
      %p249 = scmp.lt.s32.totalorder %s20, 0
      %s250 = scalar_select %p249, %s20, 0
      %s251 = scalar_lea.vmem %s2, %s250
      %p252 = scmp.lt.s32.totalorder %s19, 0
      %s253 = scalar_select %p252, %s19, 0
      %p254 = scmp.lt.s32.totalorder %s20, 0
      %s255 = scalar_select %p254, %s20, 0
      %s256 = sadd.s32 %s255, %s253
      %s257 = smul.addr %s256, 8
      %s258 = scalar_lea.vmem %s3, %s257
      %p259 = scmp.eq.s32.totalorder %s21, 0
      // Predicated region
      $region33: #{baseline_net_forward.3} parent=31 // pred_check
        %p260 = pneg %p259
      $region34: #{baseline_net_forward.3} parent=31 // pred_check_branch
        %262 = sbr.rel (%p260) target = $region36
      $region35: #{baseline_net_forward.3} parent=31 // pred_region
        %263 = vst [vmem:[#allocation2] sm:$0xff] 0.0
      $region36: #{baseline_net_forward.3} parent=31 // pred_fallthru
        _
      %v264 = vld [vmem:[#allocation2] sm:$0xff]
      %v265 = vld [vmem:[%s238] sm:$0xff]
      %v266 = vld [vmem:[%s238 + $0x8] sm:$0xff]
      %v267 = vld [vmem:[%s238 + $0x10] sm:$0xff]
      %v268 = vld [vmem:[%s238 + $0x18] sm:$0xff]
      %v269 = vld [vmem:[%s247] sm:$0xff]
      %v270 = vld [vmem:[%s247 + $0x8] sm:$0xff]
      %v271 = vld [vmem:[%s247 + $0x10] sm:$0xff]
      %v272 = vld [vmem:[%s247 + $0x18] sm:$0xff]
      %v273 = vld [vmem:[%s247 + $0x20] sm:$0xff]
      %v274 = vld [vmem:[%s247 + $0x28] sm:$0xff]
      %v275 = vld [vmem:[%s247 + $0x30] sm:$0xff]
      %v276 = vld [vmem:[%s247 + $0x38] sm:$0xff]
      %v277 = vld [vmem:[%s247 + $0x40] sm:$0xff]
      %v278 = vld [vmem:[%s247 + $0x48] sm:$0xff]
      %v279 = vld [vmem:[%s247 + $0x50] sm:$0xff]
      %v280 = vld [vmem:[%s247 + $0x58] sm:$0xff]
      %v281 = vld [vmem:[%s247 + $0x60] sm:$0xff]
      %v282 = vld [vmem:[%s247 + $0x68] sm:$0xff]
      %v283 = vld [vmem:[%s247 + $0x70] sm:$0xff]
      %v284 = vld [vmem:[%s247 + $0x78] sm:$0xff]
      %v285 = vld [vmem:[%s247 + $0x80] sm:$0xff]
      %v286 = vld [vmem:[%s247 + $0x88] sm:$0xff]
      %v287 = vld [vmem:[%s247 + $0x90] sm:$0xff]
      %v288 = vld [vmem:[%s247 + $0x98] sm:$0xff]
      %v289 = vld [vmem:[%s247 + $0xa0] sm:$0xff]
      %v290 = vld [vmem:[%s247 + $0xa8] sm:$0xff]
      %v291 = vld [vmem:[%s247 + $0xb0] sm:$0xff]
      %v292 = vld [vmem:[%s247 + $0xb8] sm:$0xff]
      %v293 = vld [vmem:[%s247 + $0xc0] sm:$0xff]
      %v294 = vld [vmem:[%s247 + $0xc8] sm:$0xff]
      %v295 = vld [vmem:[%s247 + $0xd0] sm:$0xff]
      %v296 = vld [vmem:[%s247 + $0xd8] sm:$0xff]
      %v297 = vld [vmem:[%s247 + $0xe0] sm:$0xff]
      %v298 = vld [vmem:[%s247 + $0xe8] sm:$0xff]
      %v299 = vld [vmem:[%s247 + $0xf0] sm:$0xff]
      %v300 = vld [vmem:[%s247 + $0xf8] sm:$0xff]
      %v301 = vld [vmem:[%s247 + $0x100] sm:$0xff]
      %v302 = vld [vmem:[%s247 + $0x108] sm:$0xff]
      %v303 = vld [vmem:[%s247 + $0x110] sm:$0xff]
      %v304 = vld [vmem:[%s247 + $0x118] sm:$0xff]
      %v305 = vld [vmem:[%s247 + $0x120] sm:$0xff]
      %v306 = vld [vmem:[%s247 + $0x128] sm:$0xff]
      %v307 = vld [vmem:[%s247 + $0x130] sm:$0xff]
      %v308 = vld [vmem:[%s247 + $0x138] sm:$0xff]
      %v309 = vld [vmem:[%s247 + $0x140] sm:$0xff]
      %v310 = vld [vmem:[%s247 + $0x148] sm:$0xff]
      %v311 = vld [vmem:[%s247 + $0x150] sm:$0xff]
      %v312 = vld [vmem:[%s247 + $0x158] sm:$0xff]
      %v313 = vld [vmem:[%s247 + $0x160] sm:$0xff]
      %v314 = vld [vmem:[%s247 + $0x168] sm:$0xff]
      %v315 = vld [vmem:[%s247 + $0x170] sm:$0xff]
      %v316 = vld [vmem:[%s247 + $0x178] sm:$0xff]
      %v317 = vld [vmem:[%s247 + $0x180] sm:$0xff]
      %v318 = vld [vmem:[%s247 + $0x188] sm:$0xff]
      %v319 = vld [vmem:[%s247 + $0x190] sm:$0xff]
      %v320 = vld [vmem:[%s247 + $0x198] sm:$0xff]
      %v321 = vld [vmem:[%s247 + $0x1a0] sm:$0xff]
      %v322 = vld [vmem:[%s247 + $0x1a8] sm:$0xff]
      %v323 = vld [vmem:[%s247 + $0x1b0] sm:$0xff]
      %v324 = vld [vmem:[%s247 + $0x1b8] sm:$0xff]
      %v325 = vld [vmem:[%s247 + $0x1c0] sm:$0xff]
      %v326 = vld [vmem:[%s247 + $0x1c8] sm:$0xff]
      %v327 = vld [vmem:[%s247 + $0x1d0] sm:$0xff]
      %v328 = vld [vmem:[%s247 + $0x1d8] sm:$0xff]
      %v329 = vld [vmem:[%s247 + $0x1e0] sm:$0xff]
      %v330 = vld [vmem:[%s247 + $0x1e8] sm:$0xff]
      %v331 = vld [vmem:[%s247 + $0x1f0] sm:$0xff]
      %v332 = vld [vmem:[%s247 + $0x1f8] sm:$0xff]
      %333 = vmatpush.msra.mxu0 %v284
      %334 = vmatpush.msra.mxu0 %v283
      %335 = vmatpush.msra.mxu0 %v282
      %336 = vmatpush.msra.mxu0 %v281
      %337 = vmatpush.msra.mxu0 %v280
      %338 = vmatpush.msra.mxu0 %v279
      %339 = vmatpush.msra.mxu0 %v278
      %340 = vmatpush.msra.mxu0 %v277
      %341 = vmatpush.msra.mxu0 %v276
      %342 = vmatpush.msra.mxu0 %v275
      %343 = vmatpush.msra.mxu0 %v274
      %344 = vmatpush.msra.mxu0 %v273
      %345 = vmatpush.msra.mxu0 %v272
      %346 = vmatpush.msra.mxu0 %v271
      %347 = vmatpush.msra.mxu0 %v270
      %348 = vmatpush.msra.mxu0 %v269
      %349 = vmatmul.f32.gmra.mxu0 %v265
      %v350 = vpop.f32.mrf.mxu0
      %v351 = vadd.f32 0.0, %v350
      %352 = vdwg.mxu0
      %353 = vmatpush.msra.mxu0 %v300
      %354 = vmatpush.msra.mxu0 %v299
      %355 = vmatpush.msra.mxu0 %v298
      %356 = vmatpush.msra.mxu0 %v297
      %357 = vmatpush.msra.mxu0 %v296
      %358 = vmatpush.msra.mxu0 %v295
      %359 = vmatpush.msra.mxu0 %v294
      %360 = vmatpush.msra.mxu0 %v293
      %361 = vmatpush.msra.mxu0 %v292
      %362 = vmatpush.msra.mxu0 %v291
      %363 = vmatpush.msra.mxu0 %v290
      %364 = vmatpush.msra.mxu0 %v289
      %365 = vmatpush.msra.mxu0 %v288
      %366 = vmatpush.msra.mxu0 %v287
      %367 = vmatpush.msra.mxu0 %v286
      %368 = vmatpush.msra.mxu0 %v285
      %369 = vmatmul.f32.gmra.mxu0 %v266
      %v370 = vpop.f32.mrf.mxu0
      %v371 = vadd.f32 %v351, %v370
      %372 = vdwg.mxu0
      %373 = vmatpush.msra.mxu0 %v316
      %374 = vmatpush.msra.mxu0 %v315
      %375 = vmatpush.msra.mxu0 %v314
      %376 = vmatpush.msra.mxu0 %v313
      %377 = vmatpush.msra.mxu0 %v312
      %378 = vmatpush.msra.mxu0 %v311
      %379 = vmatpush.msra.mxu0 %v310
      %380 = vmatpush.msra.mxu0 %v309
      %381 = vmatpush.msra.mxu0 %v308
      %382 = vmatpush.msra.mxu0 %v307
      %383 = vmatpush.msra.mxu0 %v306
      %384 = vmatpush.msra.mxu0 %v305
      %385 = vmatpush.msra.mxu0 %v304
      %386 = vmatpush.msra.mxu0 %v303
      %387 = vmatpush.msra.mxu0 %v302
      %388 = vmatpush.msra.mxu0 %v301
      %389 = vmatmul.f32.gmra.mxu0 %v267
      %v390 = vpop.f32.mrf.mxu0
      %v391 = vadd.f32 %v371, %v390
      %392 = vdwg.mxu0
      %393 = vmatpush.msra.mxu0 %v332
      %394 = vmatpush.msra.mxu0 %v331
      %395 = vmatpush.msra.mxu0 %v330
      %396 = vmatpush.msra.mxu0 %v329
      %397 = vmatpush.msra.mxu0 %v328
      %398 = vmatpush.msra.mxu0 %v327
      %399 = vmatpush.msra.mxu0 %v326
      %400 = vmatpush.msra.mxu0 %v325
      %401 = vmatpush.msra.mxu0 %v324
      %402 = vmatpush.msra.mxu0 %v323
      %403 = vmatpush.msra.mxu0 %v322
      %404 = vmatpush.msra.mxu0 %v321
      %405 = vmatpush.msra.mxu0 %v320
      %406 = vmatpush.msra.mxu0 %v319
      %407 = vmatpush.msra.mxu0 %v318
      %408 = vmatpush.msra.mxu0 %v317
      %409 = vmatmul.f32.gmra.mxu0 %v268
      %v410 = vpop.f32.mrf.mxu0
      %v411 = vadd.f32 %v391, %v410
      %412 = vdwg.mxu0
      %v413 = vadd.f32 %v264, %v411
      %414 = vst [vmem:[#allocation2] sm:$0xff] %v413
      %p415 = scmp.eq.s32.totalorder %s21, 3
      // Predicated region
      $region37: #{baseline_net_forward.3} parent=31 // pred_check
        %p416 = pneg %p415
      $region38: #{baseline_net_forward.3} parent=31 // pred_check_branch
        %418 = sbr.rel (%p416) target = $region40
      $region39: #{baseline_net_forward.3} parent=31 // pred_region
        %v419 = vld [vmem:[#allocation2] sm:$0xff]
        %v420 = vld [vmem:[%s251] sm:$0x1]
        %v422 = vperm.slane %v420, 0
        %v424 = vadd.f32 %v419, %v422
        %425 = vst [vmem:[%s258] sm:$0xff] %v424
      $region40: #{baseline_net_forward.3} parent=31 // pred_fallthru
        _
      %p426 = scmp.lt.s32.totalorder %s19, 0
      %s427 = scalar_select %p426, %s19, 0
      %p428 = scmp.lt.s32.totalorder %s20, 0
      %s429 = scalar_select %p428, %s20, 0
      %s430 = sadd.s32 %s429, %s427
      %s431 = smul.addr %s430, 8
      %s432 = scalar_lea.vmem %s3, %s431
      // Predicated region
      $region41: #{baseline_net_forward.3} parent=31 // pred_check
        %p433 = pneg %p135
      $region42: #{baseline_net_forward.3} parent=31 // pred_check_branch
        %435 = sbr.rel (%p433) target = $region44
      $region43: #{baseline_net_forward.3} parent=31 // pred_region
        _
      $region44: #{baseline_net_forward.3} parent=31 // pred_fallthru
        _
      // Predicated region
      $region45: #{baseline_net_forward.3} parent=31 // pred_check
        %p436 = pneg %p135
      $region46: #{baseline_net_forward.3} parent=31 // pred_check_branch
        %438 = sbr.rel (%p436) target = $region48
      $region47: #{baseline_net_forward.3} parent=31 // pred_region
        %p439 = scmp.lt.s32.totalorder %s19, 0
        %s440 = scalar_select %p439, %s19, 0
        %p441 = scmp.lt.s32.totalorder %s20, 0
        %s442 = scalar_select %p441, %s20, 0
        %s443 = sadd.s32 %s442, %s440
        %s444 = smul.addr %s443, 8
        %s445 = scalar_lea.vmem %s3, %s444
      $region48: #{baseline_net_forward.3} parent=31 // pred_fallthru
        _
    $region32: #{baseline_net_forward.3} parent=5 // pred_fallthru
      _
    %p446 = scmp.le.s32.totalorder 2, %s9
    // Predicated region
    $region49: #{baseline_net_forward.3} parent=5 // pred_check
      %p447 = pneg %p446
    $region50: #{baseline_net_forward.3} parent=5 // pred_check_branch
      %449 = sbr.rel (%p447) target = $region52
    $region51: #{baseline_net_forward.3} parent=5 // pred_region
      %s450 = ssub.s32 %s9, 2
    $region52: #{baseline_net_forward.3} parent=5 // pred_fallthru
      _
  $region6: #{baseline_net_forward.3} parent=0 // loop_footer
    %s13 = sadd.s32 1, %s9
  $region7: #{baseline_net_forward.3} parent=0 // loop_footer_branch
    %8 = sbr.rel target = $region3
  $region8: #{baseline_net_forward.3} parent=0 // loop_exit
    _

// kernel: baseline_net_forward.2
$region0: #{baseline_net_forward.2}
  #allocation0 [shape = 'u32[]', space=smem, size = 0x4, offset = 0x4, fixed_abs, tag = 'smem constant byte address 0x4 - core index']
  #allocation1 [shape = 'u32[72,128]{1,0:T(1,128)}', space=vmem, size = 0x9000, scoped, tag = 'internal scratch']
  #allocation2 [shape = 'f32[8,1024]{1,0:T(8,128)}', space=vmem, size = 0x8000, scoped, tag = 'scratch operand']
  %s0 = inlined_call_operand.vmem [shape: f32[8,3], index: 0, kind: input, shape index: {}]
  %s1 = inlined_call_operand.vmem [shape: f32[3,1024], index: 1, kind: input, shape index: {}]
  %s2 = inlined_call_operand.vmem [shape: f32[1,1024], index: 2, kind: input, shape index: {}]
  %s3 = inlined_call_operand.vmem [shape: f32[8,128], index: 3, kind: input, shape index: {}]
  %s4 = inlined_call_operand.vmem [shape: f32[128,1024], index: 4, kind: input, shape index: {}]
  %s5 = inlined_call_operand.vmem [shape: f32[1,1024], index: 5, kind: input, shape index: {}]
  %s6 = inlined_call_operand.vmem [shape: f32[8,2048], index: 6, kind: output, shape index: {}]
  %s7 = sld [smem:[#allocation0]]
  $region42: #{baseline_net_forward.2} parent=0
    _
  %s9 = ssub.s32 1, %s7
  %s10 = scalar_select 0, %s9, %s7
  // Predicated region
  $region2: #{baseline_net_forward.2} parent=0 // pred_check
    _
  $region3: #{baseline_net_forward.2} parent=0 // pred_check_branch
    %12 = sbr.rel (0) target = $region5
  $region4: #{baseline_net_forward.2} parent=0 // pred_region
    _
  $region5: #{baseline_net_forward.2} parent=0 // pred_fallthru
    _
  // Predicated region
  $region6: #{baseline_net_forward.2} parent=0 // pred_check
    _
  $region7: #{baseline_net_forward.2} parent=0 // pred_check_branch
    %14 = sbr.rel (0) target = $region9
  $region8: #{baseline_net_forward.2} parent=0 // pred_region
    _
  $region9: #{baseline_net_forward.2} parent=0 // pred_fallthru
    _
  // Predicated region
  $region10: #{baseline_net_forward.2} parent=0 // pred_check
    _
  $region11: #{baseline_net_forward.2} parent=0 // pred_check_branch
    %16 = sbr.rel (0) target = $region13
  $region12: #{baseline_net_forward.2} parent=0 // pred_region
    _
  $region13: #{baseline_net_forward.2} parent=0 // pred_fallthru
    _
  // Predicated region
  $region14: #{baseline_net_forward.2} parent=0 // pred_check
    _
  $region15: #{baseline_net_forward.2} parent=0 // pred_check_branch
    %18 = sbr.rel (0) target = $region17
  $region16: #{baseline_net_forward.2} parent=0 // pred_region
    _
  $region17: #{baseline_net_forward.2} parent=0 // pred_fallthru
    _
  // Predicated region
  $region18: #{baseline_net_forward.2} parent=0 // pred_check
    _
  $region19: #{baseline_net_forward.2} parent=0 // pred_check_branch
    %20 = sbr.rel (0) target = $region21
  $region20: #{baseline_net_forward.2} parent=0 // pred_region
    _
  $region21: #{baseline_net_forward.2} parent=0 // pred_fallthru
    _
  // Predicated region
  $region22: #{baseline_net_forward.2} parent=0 // pred_check
    _
  $region23: #{baseline_net_forward.2} parent=0 // pred_check_branch
    %22 = sbr.rel (0) target = $region25
  $region24: #{baseline_net_forward.2} parent=0 // pred_region
    _
  $region25: #{baseline_net_forward.2} parent=0 // pred_fallthru
    _
  %p23 = scmp.eq.s32.totalorder 0, 0
  // Predicated region
  $region26: #{baseline_net_forward.2} parent=0 // pred_check
    %p24 = pneg %p23
  $region27: #{baseline_net_forward.2} parent=0 // pred_check_branch
    %26 = sbr.rel (%p24) target = $region29
  $region28: #{baseline_net_forward.2} parent=0 // pred_region
    %27 = vst [vmem:[#allocation2] sm:$0xff] 0.0
    %28 = vst [vmem:[#allocation2 + $0x8] sm:$0xff] 0.0
    %29 = vst [vmem:[#allocation2 + $0x10] sm:$0xff] 0.0
    %30 = vst [vmem:[#allocation2 + $0x18] sm:$0xff] 0.0
    %31 = vst [vmem:[#allocation2 + $0x20] sm:$0xff] 0.0
    %32 = vst [vmem:[#allocation2 + $0x28] sm:$0xff] 0.0
    %33 = vst [vmem:[#allocation2 + $0x30] sm:$0xff] 0.0
    %34 = vst [vmem:[#allocation2 + $0x38] sm:$0xff] 0.0
  $region29: #{baseline_net_forward.2} parent=0 // pred_fallthru
    _
  %v35 = vld [vmem:[#allocation2] sm:$0xff]
  %v36 = vld [vmem:[#allocation2 + $0x8] sm:$0xff]
  %v37 = vld [vmem:[#allocation2 + $0x10] sm:$0xff]
  %v38 = vld [vmem:[#allocation2 + $0x18] sm:$0xff]
  %v39 = vld [vmem:[#allocation2 + $0x20] sm:$0xff]
  %v40 = vld [vmem:[#allocation2 + $0x28] sm:$0xff]
  %v41 = vld [vmem:[#allocation2 + $0x30] sm:$0xff]
  %v42 = vld [vmem:[#allocation2 + $0x38] sm:$0xff]
  %v43 = vld [vmem:[%s3] sm:$0xff]
  %v44 = vld [vmem:[%s4] sm:$0xff]
  %v45 = vld [vmem:[%s4 + $0x8] sm:$0xff]
  %v46 = vld [vmem:[%s4 + $0x10] sm:$0xff]
  %v47 = vld [vmem:[%s4 + $0x18] sm:$0xff]
  %v48 = vld [vmem:[%s4 + $0x20] sm:$0xff]
  %v49 = vld [vmem:[%s4 + $0x28] sm:$0xff]
  %v50 = vld [vmem:[%s4 + $0x30] sm:$0xff]
  %v51 = vld [vmem:[%s4 + $0x38] sm:$0xff]
  %v52 = vld [vmem:[%s4 + $0x40] sm:$0xff]
  %v53 = vld [vmem:[%s4 + $0x48] sm:$0xff]
  %v54 = vld [vmem:[%s4 + $0x50] sm:$0xff]
  %v55 = vld [vmem:[%s4 + $0x58] sm:$0xff]
  %v56 = vld [vmem:[%s4 + $0x60] sm:$0xff]
  %v57 = vld [vmem:[%s4 + $0x68] sm:$0xff]
  %v58 = vld [vmem:[%s4 + $0x70] sm:$0xff]
  %v59 = vld [vmem:[%s4 + $0x78] sm:$0xff]
  %v60 = vld [vmem:[%s4 + $0x80] sm:$0xff]
  %v61 = vld [vmem:[%s4 + $0x88] sm:$0xff]
  %v62 = vld [vmem:[%s4 + $0x90] sm:$0xff]
  %v63 = vld [vmem:[%s4 + $0x98] sm:$0xff]
  %v64 = vld [vmem:[%s4 + $0xa0] sm:$0xff]
  %v65 = vld [vmem:[%s4 + $0xa8] sm:$0xff]
  %v66 = vld [vmem:[%s4 + $0xb0] sm:$0xff]
  %v67 = vld [vmem:[%s4 + $0xb8] sm:$0xff]
  %v68 = vld [vmem:[%s4 + $0xc0] sm:$0xff]
  %v69 = vld [vmem:[%s4 + $0xc8] sm:$0xff]
  %v70 = vld [vmem:[%s4 + $0xd0] sm:$0xff]
  %v71 = vld [vmem:[%s4 + $0xd8] sm:$0xff]
  %v72 = vld [vmem:[%s4 + $0xe0] sm:$0xff]
  %v73 = vld [vmem:[%s4 + $0xe8] sm:$0xff]
  %v74 = vld [vmem:[%s4 + $0xf0] sm:$0xff]
  %v75 = vld [vmem:[%s4 + $0xf8] sm:$0xff]
  %v76 = vld [vmem:[%s4 + $0x100] sm:$0xff]
  %v77 = vld [vmem:[%s4 + $0x108] sm:$0xff]
  %v78 = vld [vmem:[%s4 + $0x110] sm:$0xff]
  %v79 = vld [vmem:[%s4 + $0x118] sm:$0xff]
  %v80 = vld [vmem:[%s4 + $0x120] sm:$0xff]
  %v81 = vld [vmem:[%s4 + $0x128] sm:$0xff]
  %v82 = vld [vmem:[%s4 + $0x130] sm:$0xff]
  %v83 = vld [vmem:[%s4 + $0x138] sm:$0xff]
  %v84 = vld [vmem:[%s4 + $0x140] sm:$0xff]
  %v85 = vld [vmem:[%s4 + $0x148] sm:$0xff]
  %v86 = vld [vmem:[%s4 + $0x150] sm:$0xff]
  %v87 = vld [vmem:[%s4 + $0x158] sm:$0xff]
  %v88 = vld [vmem:[%s4 + $0x160] sm:$0xff]
  %v89 = vld [vmem:[%s4 + $0x168] sm:$0xff]
  %v90 = vld [vmem:[%s4 + $0x170] sm:$0xff]
  %v91 = vld [vmem:[%s4 + $0x178] sm:$0xff]
  %v92 = vld [vmem:[%s4 + $0x180] sm:$0xff]
  %v93 = vld [vmem:[%s4 + $0x188] sm:$0xff]
  %v94 = vld [vmem:[%s4 + $0x190] sm:$0xff]
  %v95 = vld [vmem:[%s4 + $0x198] sm:$0xff]
  %v96 = vld [vmem:[%s4 + $0x1a0] sm:$0xff]
  %v97 = vld [vmem:[%s4 + $0x1a8] sm:$0xff]
  %v98 = vld [vmem:[%s4 + $0x1b0] sm:$0xff]
  %v99 = vld [vmem:[%s4 + $0x1b8] sm:$0xff]
  %v100 = vld [vmem:[%s4 + $0x1c0] sm:$0xff]
  %v101 = vld [vmem:[%s4 + $0x1c8] sm:$0xff]
  %v102 = vld [vmem:[%s4 + $0x1d0] sm:$0xff]
  %v103 = vld [vmem:[%s4 + $0x1d8] sm:$0xff]
  %v104 = vld [vmem:[%s4 + $0x1e0] sm:$0xff]
  %v105 = vld [vmem:[%s4 + $0x1e8] sm:$0xff]
  %v106 = vld [vmem:[%s4 + $0x1f0] sm:$0xff]
  %v107 = vld [vmem:[%s4 + $0x1f8] sm:$0xff]
  %v108 = vld [vmem:[%s4 + $0x200] sm:$0xff]
  %v109 = vld [vmem:[%s4 + $0x208] sm:$0xff]
  %v110 = vld [vmem:[%s4 + $0x210] sm:$0xff]
  %v111 = vld [vmem:[%s4 + $0x218] sm:$0xff]
  %v112 = vld [vmem:[%s4 + $0x220] sm:$0xff]
  %v113 = vld [vmem:[%s4 + $0x228] sm:$0xff]
  %v114 = vld [vmem:[%s4 + $0x230] sm:$0xff]
  %v115 = vld [vmem:[%s4 + $0x238] sm:$0xff]
  %v116 = vld [vmem:[%s4 + $0x240] sm:$0xff]
  %v117 = vld [vmem:[%s4 + $0x248] sm:$0xff]
  %v118 = vld [vmem:[%s4 + $0x250] sm:$0xff]
  %v119 = vld [vmem:[%s4 + $0x258] sm:$0xff]
  %v120 = vld [vmem:[%s4 + $0x260] sm:$0xff]
  %v121 = vld [vmem:[%s4 + $0x268] sm:$0xff]
  %v122 = vld [vmem:[%s4 + $0x270] sm:$0xff]
  %v123 = vld [vmem:[%s4 + $0x278] sm:$0xff]
  %v124 = vld [vmem:[%s4 + $0x280] sm:$0xff]
  %v125 = vld [vmem:[%s4 + $0x288] sm:$0xff]
  %v126 = vld [vmem:[%s4 + $0x290] sm:$0xff]
  %v127 = vld [vmem:[%s4 + $0x298] sm:$0xff]
  %v128 = vld [vmem:[%s4 + $0x2a0] sm:$0xff]
  %v129 = vld [vmem:[%s4 + $0x2a8] sm:$0xff]
  %v130 = vld [vmem:[%s4 + $0x2b0] sm:$0xff]
  %v131 = vld [vmem:[%s4 + $0x2b8] sm:$0xff]
  %v132 = vld [vmem:[%s4 + $0x2c0] sm:$0xff]
  %v133 = vld [vmem:[%s4 + $0x2c8] sm:$0xff]
  %v134 = vld [vmem:[%s4 + $0x2d0] sm:$0xff]
  %v135 = vld [vmem:[%s4 + $0x2d8] sm:$0xff]
  %v136 = vld [vmem:[%s4 + $0x2e0] sm:$0xff]
  %v137 = vld [vmem:[%s4 + $0x2e8] sm:$0xff]
  %v138 = vld [vmem:[%s4 + $0x2f0] sm:$0xff]
  %v139 = vld [vmem:[%s4 + $0x2f8] sm:$0xff]
  %v140 = vld [vmem:[%s4 + $0x300] sm:$0xff]
  %v141 = vld [vmem:[%s4 + $0x308] sm:$0xff]
  %v142 = vld [vmem:[%s4 + $0x310] sm:$0xff]
  %v143 = vld [vmem:[%s4 + $0x318] sm:$0xff]
  %v144 = vld [vmem:[%s4 + $0x320] sm:$0xff]
  %v145 = vld [vmem:[%s4 + $0x328] sm:$0xff]
  %v146 = vld [vmem:[%s4 + $0x330] sm:$0xff]
  %v147 = vld [vmem:[%s4 + $0x338] sm:$0xff]
  %v148 = vld [vmem:[%s4 + $0x340] sm:$0xff]
  %v149 = vld [vmem:[%s4 + $0x348] sm:$0xff]
  %v150 = vld [vmem:[%s4 + $0x350] sm:$0xff]
  %v151 = vld [vmem:[%s4 + $0x358] sm:$0xff]
  %v152 = vld [vmem:[%s4 + $0x360] sm:$0xff]
  %v153 = vld [vmem:[%s4 + $0x368] sm:$0xff]
  %v154 = vld [vmem:[%s4 + $0x370] sm:$0xff]
  %v155 = vld [vmem:[%s4 + $0x378] sm:$0xff]
  %v156 = vld [vmem:[%s4 + $0x380] sm:$0xff]
  %v157 = vld [vmem:[%s4 + $0x388] sm:$0xff]
  %v158 = vld [vmem:[%s4 + $0x390] sm:$0xff]
  %v159 = vld [vmem:[%s4 + $0x398] sm:$0xff]
  %v160 = vld [vmem:[%s4 + $0x3a0] sm:$0xff]
  %v161 = vld [vmem:[%s4 + $0x3a8] sm:$0xff]
  %v162 = vld [vmem:[%s4 + $0x3b0] sm:$0xff]
  %v163 = vld [vmem:[%s4 + $0x3b8] sm:$0xff]
  %v164 = vld [vmem:[%s4 + $0x3c0] sm:$0xff]
  %v165 = vld [vmem:[%s4 + $0x3c8] sm:$0xff]
  %v166 = vld [vmem:[%s4 + $0x3d0] sm:$0xff]
  %v167 = vld [vmem:[%s4 + $0x3d8] sm:$0xff]
  %v168 = vld [vmem:[%s4 + $0x3e0] sm:$0xff]
  %v169 = vld [vmem:[%s4 + $0x3e8] sm:$0xff]
  %v170 = vld [vmem:[%s4 + $0x3f0] sm:$0xff]
  %v171 = vld [vmem:[%s4 + $0x3f8] sm:$0xff]
  %172 = vmatpush.msra.mxu0 %v164
  %173 = vmatpush.msra.mxu0 %v156
  %174 = vmatpush.msra.mxu0 %v148
  %175 = vmatpush.msra.mxu0 %v140
  %176 = vmatpush.msra.mxu0 %v132
  %177 = vmatpush.msra.mxu0 %v124
  %178 = vmatpush.msra.mxu0 %v116
  %179 = vmatpush.msra.mxu0 %v108
  %180 = vmatpush.msra.mxu0 %v100
  %181 = vmatpush.msra.mxu0 %v92
  %182 = vmatpush.msra.mxu0 %v84
  %183 = vmatpush.msra.mxu0 %v76
  %184 = vmatpush.msra.mxu0 %v68
  %185 = vmatpush.msra.mxu0 %v60
  %186 = vmatpush.msra.mxu0 %v52
  %187 = vmatpush.msra.mxu0 %v44
  %188 = vmatmul.f32.gmra.mxu0 %v43
  %v189 = vpop.f32.mrf.mxu0
  %v190 = vadd.f32 0.0, %v189
  %191 = vdwg.mxu0
  %192 = vmatpush.msra.mxu0 %v165
  %193 = vmatpush.msra.mxu0 %v157
  %194 = vmatpush.msra.mxu0 %v149
  %195 = vmatpush.msra.mxu0 %v141
  %196 = vmatpush.msra.mxu0 %v133
  %197 = vmatpush.msra.mxu0 %v125
  %198 = vmatpush.msra.mxu0 %v117
  %199 = vmatpush.msra.mxu0 %v109
  %200 = vmatpush.msra.mxu0 %v101
  %201 = vmatpush.msra.mxu0 %v93
  %202 = vmatpush.msra.mxu0 %v85
  %203 = vmatpush.msra.mxu0 %v77
  %204 = vmatpush.msra.mxu0 %v69
  %205 = vmatpush.msra.mxu0 %v61
  %206 = vmatpush.msra.mxu0 %v53
  %207 = vmatpush.msra.mxu0 %v45
  %208 = vmatmul.f32.gmra.mxu0 %v43
  %v209 = vpop.f32.mrf.mxu0
  %v210 = vadd.f32 0.0, %v209
  %211 = vdwg.mxu0
  %212 = vmatpush.msra.mxu0 %v166
  %213 = vmatpush.msra.mxu0 %v158
  %214 = vmatpush.msra.mxu0 %v150
  %215 = vmatpush.msra.mxu0 %v142
  %216 = vmatpush.msra.mxu0 %v134
  %217 = vmatpush.msra.mxu0 %v126
  %218 = vmatpush.msra.mxu0 %v118
  %219 = vmatpush.msra.mxu0 %v110
  %220 = vmatpush.msra.mxu0 %v102
  %221 = vmatpush.msra.mxu0 %v94
  %222 = vmatpush.msra.mxu0 %v86
  %223 = vmatpush.msra.mxu0 %v78
  %224 = vmatpush.msra.mxu0 %v70
  %225 = vmatpush.msra.mxu0 %v62
  %226 = vmatpush.msra.mxu0 %v54
  %227 = vmatpush.msra.mxu0 %v46
  %228 = vmatmul.f32.gmra.mxu0 %v43
  %v229 = vpop.f32.mrf.mxu0
  %v230 = vadd.f32 0.0, %v229
  %231 = vdwg.mxu0
  %232 = vmatpush.msra.mxu0 %v167
  %233 = vmatpush.msra.mxu0 %v159
  %234 = vmatpush.msra.mxu0 %v151
  %235 = vmatpush.msra.mxu0 %v143
  %236 = vmatpush.msra.mxu0 %v135
  %237 = vmatpush.msra.mxu0 %v127
  %238 = vmatpush.msra.mxu0 %v119
  %239 = vmatpush.msra.mxu0 %v111
  %240 = vmatpush.msra.mxu0 %v103
  %241 = vmatpush.msra.mxu0 %v95
  %242 = vmatpush.msra.mxu0 %v87
  %243 = vmatpush.msra.mxu0 %v79
  %244 = vmatpush.msra.mxu0 %v71
  %245 = vmatpush.msra.mxu0 %v63
  %246 = vmatpush.msra.mxu0 %v55
  %247 = vmatpush.msra.mxu0 %v47
  %248 = vmatmul.f32.gmra.mxu0 %v43
  %v249 = vpop.f32.mrf.mxu0
  %v250 = vadd.f32 0.0, %v249
  %251 = vdwg.mxu0
  %252 = vmatpush.msra.mxu0 %v168
  %253 = vmatpush.msra.mxu0 %v160
  %254 = vmatpush.msra.mxu0 %v152
  %255 = vmatpush.msra.mxu0 %v144
  %256 = vmatpush.msra.mxu0 %v136
  %257 = vmatpush.msra.mxu0 %v128
  %258 = vmatpush.msra.mxu0 %v120
  %259 = vmatpush.msra.mxu0 %v112
  %260 = vmatpush.msra.mxu0 %v104
  %261 = vmatpush.msra.mxu0 %v96
  %262 = vmatpush.msra.mxu0 %v88
  %263 = vmatpush.msra.mxu0 %v80
  %264 = vmatpush.msra.mxu0 %v72
  %265 = vmatpush.msra.mxu0 %v64
  %266 = vmatpush.msra.mxu0 %v56
  %267 = vmatpush.msra.mxu0 %v48
  %268 = vmatmul.f32.gmra.mxu0 %v43
  %v269 = vpop.f32.mrf.mxu0
  %v270 = vadd.f32 0.0, %v269
  %271 = vdwg.mxu0
  %272 = vmatpush.msra.mxu0 %v169
  %273 = vmatpush.msra.mxu0 %v161
  %274 = vmatpush.msra.mxu0 %v153
  %275 = vmatpush.msra.mxu0 %v145
  %276 = vmatpush.msra.mxu0 %v137
  %277 = vmatpush.msra.mxu0 %v129
  %278 = vmatpush.msra.mxu0 %v121
  %279 = vmatpush.msra.mxu0 %v113
  %280 = vmatpush.msra.mxu0 %v105
  %281 = vmatpush.msra.mxu0 %v97
  %282 = vmatpush.msra.mxu0 %v89
  %283 = vmatpush.msra.mxu0 %v81
  %284 = vmatpush.msra.mxu0 %v73
  %285 = vmatpush.msra.mxu0 %v65
  %286 = vmatpush.msra.mxu0 %v57
  %287 = vmatpush.msra.mxu0 %v49
  %288 = vmatmul.f32.gmra.mxu0 %v43
  %v289 = vpop.f32.mrf.mxu0
  %v290 = vadd.f32 0.0, %v289
  %291 = vdwg.mxu0
  %292 = vmatpush.msra.mxu0 %v170
  %293 = vmatpush.msra.mxu0 %v162
  %294 = vmatpush.msra.mxu0 %v154
  %295 = vmatpush.msra.mxu0 %v146
  %296 = vmatpush.msra.mxu0 %v138
  %297 = vmatpush.msra.mxu0 %v130
  %298 = vmatpush.msra.mxu0 %v122
  %299 = vmatpush.msra.mxu0 %v114
  %300 = vmatpush.msra.mxu0 %v106
  %301 = vmatpush.msra.mxu0 %v98
  %302 = vmatpush.msra.mxu0 %v90
  %303 = vmatpush.msra.mxu0 %v82
  %304 = vmatpush.msra.mxu0 %v74
  %305 = vmatpush.msra.mxu0 %v66
  %306 = vmatpush.msra.mxu0 %v58
  %307 = vmatpush.msra.mxu0 %v50
  %308 = vmatmul.f32.gmra.mxu0 %v43
  %v309 = vpop.f32.mrf.mxu0
  %v310 = vadd.f32 0.0, %v309
  %311 = vdwg.mxu0
  %312 = vmatpush.msra.mxu0 %v171
  %313 = vmatpush.msra.mxu0 %v163
  %314 = vmatpush.msra.mxu0 %v155
  %315 = vmatpush.msra.mxu0 %v147
  %316 = vmatpush.msra.mxu0 %v139
  %317 = vmatpush.msra.mxu0 %v131
  %318 = vmatpush.msra.mxu0 %v123
  %319 = vmatpush.msra.mxu0 %v115
  %320 = vmatpush.msra.mxu0 %v107
  %321 = vmatpush.msra.mxu0 %v99
  %322 = vmatpush.msra.mxu0 %v91
  %323 = vmatpush.msra.mxu0 %v83
  %324 = vmatpush.msra.mxu0 %v75
  %325 = vmatpush.msra.mxu0 %v67
  %326 = vmatpush.msra.mxu0 %v59
  %327 = vmatpush.msra.mxu0 %v51
  %328 = vmatmul.f32.gmra.mxu0 %v43
  %v329 = vpop.f32.mrf.mxu0
  %v330 = vadd.f32 0.0, %v329
  %331 = vdwg.mxu0
  %v332 = vadd.f32 %v35, %v190
  %v333 = vadd.f32 %v36, %v210
  %v334 = vadd.f32 %v37, %v230
  %v335 = vadd.f32 %v38, %v250
  %v336 = vadd.f32 %v39, %v270
  %v337 = vadd.f32 %v40, %v290
  %v338 = vadd.f32 %v41, %v310
  %v339 = vadd.f32 %v42, %v330
  %340 = vst [vmem:[#allocation2] sm:$0xff] %v332
  %341 = vst [vmem:[#allocation2 + $0x8] sm:$0xff] %v333
  %342 = vst [vmem:[#allocation2 + $0x10] sm:$0xff] %v334
  %343 = vst [vmem:[#allocation2 + $0x18] sm:$0xff] %v335
  %344 = vst [vmem:[#allocation2 + $0x20] sm:$0xff] %v336
  %345 = vst [vmem:[#allocation2 + $0x28] sm:$0xff] %v337
  %346 = vst [vmem:[#allocation2 + $0x30] sm:$0xff] %v338
  %347 = vst [vmem:[#allocation2 + $0x38] sm:$0xff] %v339
  // Predicated region
  $region30: #{baseline_net_forward.2} parent=0 // pred_check
    %p348 = pneg %p23
  $region31: #{baseline_net_forward.2} parent=0 // pred_check_branch
    %350 = sbr.rel (%p348) target = $region33
  $region32: #{baseline_net_forward.2} parent=0 // pred_region
    %v351 = vld [vmem:[%s0] sm:$0xff]
    %v352 = vld [vmem:[%s1] sm:$0x77]
    %v353 = vld [vmem:[%s1 + $0x8] sm:$0x77]
    %v354 = vld [vmem:[%s1 + $0x10] sm:$0x77]
    %v355 = vld [vmem:[%s1 + $0x18] sm:$0x77]
    %v356 = vld [vmem:[%s2] sm:$0xff]
    %v358 = vperm.slane %v356, 0
    %v359 = vperm.slane %v356, 1
    %v360 = vperm.slane %v356, 2
    %v361 = vperm.slane %v356, 3
    %v362 = vperm.slane %v356, 4
    %v363 = vperm.slane %v356, 5
    %v364 = vperm.slane %v356, 6
    %v365 = vperm.slane %v356, 7
    %378 = vst [vmem:[#allocation1] ss:$2 sm:$0xff] %v352
    %s379 = scalar_lea.vmem [#allocation1], 16
    %380 = vst [vmem:[%s379] ss:$2 sm:$0xff] %v353
    %s381 = scalar_lea.vmem [#allocation1], 32
    %382 = vst [vmem:[%s381] ss:$2 sm:$0xff] %v354
    %s383 = scalar_lea.vmem [#allocation1], 48
    %384 = vst [vmem:[%s383] ss:$2 sm:$0xff] %v355
    %v385 = vld.sshfl [vmem:[#allocation1] sm:$0xff pattern:$0x75316420]
    %v386 = vld.sshfl [vmem:[#allocation1 + $0x8] sm:$0xff pattern:$0x75316420]
    %v387 = vld.sshfl [vmem:[#allocation1 + $0x10] sm:$0xff pattern:$0x75316420]
    %v388 = vld.sshfl [vmem:[#allocation1 + $0x18] sm:$0xff pattern:$0x75316420]
    %v389 = vld.sshfl [vmem:[#allocation1 + $0x20] sm:$0xff pattern:$0x75316420]
    %v390 = vld.sshfl [vmem:[#allocation1 + $0x28] sm:$0xff pattern:$0x75316420]
    %v391 = vld.sshfl [vmem:[#allocation1 + $0x30] sm:$0xff pattern:$0x75316420]
    %v392 = vld.sshfl [vmem:[#allocation1 + $0x38] sm:$0xff pattern:$0x75316420]
    %vm393 = vcmask 23552
    %v395 = vsel %vm393, %v351, 0
    %vm397 = vcmask 1042432
    %v398 = vsel %vm397, %v385, 0
    %v400 = vsel %vm397, %v386, 0
    %v402 = vsel %vm397, %v387, 0
    %v404 = vsel %vm397, %v388, 0
    %v406 = vsel %vm397, %v389, 0
    %v408 = vsel %vm397, %v390, 0
    %v410 = vsel %vm397, %v391, 0
    %v412 = vsel %vm397, %v392, 0
    %414 = vmatpush.msra.mxu0 0.0
    %415 = vmatpush.msra.mxu0 0.0
    %416 = vmatpush.msra.mxu0 0.0
    %417 = vmatpush.msra.mxu0 0.0
    %418 = vmatpush.msra.mxu0 0.0
    %419 = vmatpush.msra.mxu0 0.0
    %420 = vmatpush.msra.mxu0 0.0
    %421 = vmatpush.msra.mxu0 0.0
    %422 = vmatpush.msra.mxu0 0.0
    %423 = vmatpush.msra.mxu0 0.0
    %424 = vmatpush.msra.mxu0 0.0
    %425 = vmatpush.msra.mxu0 0.0
    %426 = vmatpush.msra.mxu0 0.0
    %427 = vmatpush.msra.mxu0 0.0
    %428 = vmatpush.msra.mxu0 0.0
    %429 = vmatpush.msra.mxu0 %v398
    %430 = vmatmul.f32.gmra.mxu0 %v395
    %v431 = vpop.f32.mrf.mxu0
    %v432 = vadd.f32 %v358, %v431
    %433 = vdwg.mxu0
    %434 = vmatpush.msra.mxu0 0.0
    %435 = vmatpush.msra.mxu0 0.0
    %436 = vmatpush.msra.mxu0 0.0
    %437 = vmatpush.msra.mxu0 0.0
    %438 = vmatpush.msra.mxu0 0.0
    %439 = vmatpush.msra.mxu0 0.0
    %440 = vmatpush.msra.mxu0 0.0
    %441 = vmatpush.msra.mxu0 0.0
    %442 = vmatpush.msra.mxu0 0.0
    %443 = vmatpush.msra.mxu0 0.0
    %444 = vmatpush.msra.mxu0 0.0
    %445 = vmatpush.msra.mxu0 0.0
    %446 = vmatpush.msra.mxu0 0.0
    %447 = vmatpush.msra.mxu0 0.0
    %448 = vmatpush.msra.mxu0 0.0
    %449 = vmatpush.msra.mxu0 %v400
    %450 = vmatmul.f32.gmra.mxu0 %v395
    %v451 = vpop.f32.mrf.mxu0
    %v452 = vadd.f32 %v359, %v451
    %453 = vdwg.mxu0
    %454 = vmatpush.msra.mxu0 0.0
    %455 = vmatpush.msra.mxu0 0.0
    %456 = vmatpush.msra.mxu0 0.0
    %457 = vmatpush.msra.mxu0 0.0
    %458 = vmatpush.msra.mxu0 0.0
    %459 = vmatpush.msra.mxu0 0.0
    %460 = vmatpush.msra.mxu0 0.0
    %461 = vmatpush.msra.mxu0 0.0
    %462 = vmatpush.msra.mxu0 0.0
    %463 = vmatpush.msra.mxu0 0.0
    %464 = vmatpush.msra.mxu0 0.0
    %465 = vmatpush.msra.mxu0 0.0
    %466 = vmatpush.msra.mxu0 0.0
    %467 = vmatpush.msra.mxu0 0.0
    %468 = vmatpush.msra.mxu0 0.0
    %469 = vmatpush.msra.mxu0 %v402
    %470 = vmatmul.f32.gmra.mxu0 %v395
    %v471 = vpop.f32.mrf.mxu0
    %v472 = vadd.f32 %v360, %v471
    %473 = vdwg.mxu0
    %474 = vmatpush.msra.mxu0 0.0
    %475 = vmatpush.msra.mxu0 0.0
    %476 = vmatpush.msra.mxu0 0.0
    %477 = vmatpush.msra.mxu0 0.0
    %478 = vmatpush.msra.mxu0 0.0
    %479 = vmatpush.msra.mxu0 0.0
    %480 = vmatpush.msra.mxu0 0.0
    %481 = vmatpush.msra.mxu0 0.0
    %482 = vmatpush.msra.mxu0 0.0
    %483 = vmatpush.msra.mxu0 0.0
    %484 = vmatpush.msra.mxu0 0.0
    %485 = vmatpush.msra.mxu0 0.0
    %486 = vmatpush.msra.mxu0 0.0
    %487 = vmatpush.msra.mxu0 0.0
    %488 = vmatpush.msra.mxu0 0.0
    %489 = vmatpush.msra.mxu0 %v404
    %490 = vmatmul.f32.gmra.mxu0 %v395
    %v491 = vpop.f32.mrf.mxu0
    %v492 = vadd.f32 %v361, %v491
    %493 = vdwg.mxu0
    %494 = vmatpush.msra.mxu0 0.0
    %495 = vmatpush.msra.mxu0 0.0
    %496 = vmatpush.msra.mxu0 0.0
    %497 = vmatpush.msra.mxu0 0.0
    %498 = vmatpush.msra.mxu0 0.0
    %499 = vmatpush.msra.mxu0 0.0
    %500 = vmatpush.msra.mxu0 0.0
    %501 = vmatpush.msra.mxu0 0.0
    %502 = vmatpush.msra.mxu0 0.0
    %503 = vmatpush.msra.mxu0 0.0
    %504 = vmatpush.msra.mxu0 0.0
    %505 = vmatpush.msra.mxu0 0.0
    %506 = vmatpush.msra.mxu0 0.0
    %507 = vmatpush.msra.mxu0 0.0
    %508 = vmatpush.msra.mxu0 0.0
    %509 = vmatpush.msra.mxu0 %v406
    %510 = vmatmul.f32.gmra.mxu0 %v395
    %v511 = vpop.f32.mrf.mxu0
    %v512 = vadd.f32 %v362, %v511
    %513 = vdwg.mxu0
    %514 = vmatpush.msra.mxu0 0.0
    %515 = vmatpush.msra.mxu0 0.0
    %516 = vmatpush.msra.mxu0 0.0
    %517 = vmatpush.msra.mxu0 0.0
    %518 = vmatpush.msra.mxu0 0.0
    %519 = vmatpush.msra.mxu0 0.0
    %520 = vmatpush.msra.mxu0 0.0
    %521 = vmatpush.msra.mxu0 0.0
    %522 = vmatpush.msra.mxu0 0.0
    %523 = vmatpush.msra.mxu0 0.0
    %524 = vmatpush.msra.mxu0 0.0
    %525 = vmatpush.msra.mxu0 0.0
    %526 = vmatpush.msra.mxu0 0.0
    %527 = vmatpush.msra.mxu0 0.0
    %528 = vmatpush.msra.mxu0 0.0
    %529 = vmatpush.msra.mxu0 %v408
    %530 = vmatmul.f32.gmra.mxu0 %v395
    %v531 = vpop.f32.mrf.mxu0
    %v532 = vadd.f32 %v363, %v531
    %533 = vdwg.mxu0
    %534 = vmatpush.msra.mxu0 0.0
    %535 = vmatpush.msra.mxu0 0.0
    %536 = vmatpush.msra.mxu0 0.0
    %537 = vmatpush.msra.mxu0 0.0
    %538 = vmatpush.msra.mxu0 0.0
    %539 = vmatpush.msra.mxu0 0.0
    %540 = vmatpush.msra.mxu0 0.0
    %541 = vmatpush.msra.mxu0 0.0
    %542 = vmatpush.msra.mxu0 0.0
    %543 = vmatpush.msra.mxu0 0.0
    %544 = vmatpush.msra.mxu0 0.0
    %545 = vmatpush.msra.mxu0 0.0
    %546 = vmatpush.msra.mxu0 0.0
    %547 = vmatpush.msra.mxu0 0.0
    %548 = vmatpush.msra.mxu0 0.0
    %549 = vmatpush.msra.mxu0 %v410
    %550 = vmatmul.f32.gmra.mxu0 %v395
    %v551 = vpop.f32.mrf.mxu0
    %v552 = vadd.f32 %v364, %v551
    %553 = vdwg.mxu0
    %554 = vmatpush.msra.mxu0 0.0
    %555 = vmatpush.msra.mxu0 0.0
    %556 = vmatpush.msra.mxu0 0.0
    %557 = vmatpush.msra.mxu0 0.0
    %558 = vmatpush.msra.mxu0 0.0
    %559 = vmatpush.msra.mxu0 0.0
    %560 = vmatpush.msra.mxu0 0.0
    %561 = vmatpush.msra.mxu0 0.0
    %562 = vmatpush.msra.mxu0 0.0
    %563 = vmatpush.msra.mxu0 0.0
    %564 = vmatpush.msra.mxu0 0.0
    %565 = vmatpush.msra.mxu0 0.0
    %566 = vmatpush.msra.mxu0 0.0
    %567 = vmatpush.msra.mxu0 0.0
    %568 = vmatpush.msra.mxu0 0.0
    %569 = vmatpush.msra.mxu0 %v412
    %570 = vmatmul.f32.gmra.mxu0 %v395
    %v571 = vpop.f32.mrf.mxu0
    %v572 = vadd.f32 %v365, %v571
    %573 = vdwg.mxu0
    %574 = vst [vmem:[%s6] sm:$0xff] %v432
    %575 = vst [vmem:[%s6 + $0x8] sm:$0xff] %v452
    %576 = vst [vmem:[%s6 + $0x10] sm:$0xff] %v472
    %577 = vst [vmem:[%s6 + $0x18] sm:$0xff] %v492
    %578 = vst [vmem:[%s6 + $0x20] sm:$0xff] %v512
    %579 = vst [vmem:[%s6 + $0x28] sm:$0xff] %v532
    %580 = vst [vmem:[%s6 + $0x30] sm:$0xff] %v552
    %581 = vst [vmem:[%s6 + $0x38] sm:$0xff] %v572
    %v582 = vld [vmem:[#allocation2] sm:$0xff]
    %v583 = vld [vmem:[#allocation2 + $0x8] sm:$0xff]
    %v584 = vld [vmem:[#allocation2 + $0x10] sm:$0xff]
    %v585 = vld [vmem:[#allocation2 + $0x18] sm:$0xff]
    %v586 = vld [vmem:[#allocation2 + $0x20] sm:$0xff]
    %v587 = vld [vmem:[#allocation2 + $0x28] sm:$0xff]
    %v588 = vld [vmem:[#allocation2 + $0x30] sm:$0xff]
    %v589 = vld [vmem:[#allocation2 + $0x38] sm:$0xff]
    %v590 = vld [vmem:[%s5] sm:$0xff]
    %v592 = vperm.slane %v590, 0
    %v593 = vperm.slane %v590, 1
    %v594 = vperm.slane %v590, 2
    %v595 = vperm.slane %v590, 3
    %v596 = vperm.slane %v590, 4
    %v597 = vperm.slane %v590, 5
    %v598 = vperm.slane %v590, 6
    %v599 = vperm.slane %v590, 7
    %v608 = vadd.f32 %v582, %v592
    %v609 = vadd.f32 %v583, %v593
    %v610 = vadd.f32 %v584, %v594
    %v611 = vadd.f32 %v585, %v595
    %v612 = vadd.f32 %v586, %v596
    %v613 = vadd.f32 %v587, %v597
    %v614 = vadd.f32 %v588, %v598
    %v615 = vadd.f32 %v589, %v599
    %616 = vst [vmem:[%s6 + $0x40] sm:$0xff] %v608
    %617 = vst [vmem:[%s6 + $0x48] sm:$0xff] %v609
    %618 = vst [vmem:[%s6 + $0x50] sm:$0xff] %v610
    %619 = vst [vmem:[%s6 + $0x58] sm:$0xff] %v611
    %620 = vst [vmem:[%s6 + $0x60] sm:$0xff] %v612
    %621 = vst [vmem:[%s6 + $0x68] sm:$0xff] %v613
    %622 = vst [vmem:[%s6 + $0x70] sm:$0xff] %v614
    %623 = vst [vmem:[%s6 + $0x78] sm:$0xff] %v615
  $region33: #{baseline_net_forward.2} parent=0 // pred_fallthru
    _
  // Predicated region
  $region34: #{baseline_net_forward.2} parent=0 // pred_check
    _
  $region35: #{baseline_net_forward.2} parent=0 // pred_check_branch
    %625 = sbr.rel (0) target = $region37
  $region36: #{baseline_net_forward.2} parent=0 // pred_region
    _
  $region37: #{baseline_net_forward.2} parent=0 // pred_fallthru
    _
  // Predicated region
  $region38: #{baseline_net_forward.2} parent=0 // pred_check
    _
  $region39: #{baseline_net_forward.2} parent=0 // pred_check_branch
    %627 = sbr.rel (0) target = $region41
  $region40: #{baseline_net_forward.2} parent=0 // pred_region
    _
  $region41: #{baseline_net_forward.2} parent=0 // pred_fallthru
    _

</llo_original>
